<compile_context>
chip_gen: v7x
topology: tpu7x:2x2x1
jax: 0.10.0
libtpu: 0.0.40
codegen_flags: <defaults>
</compile_context>

<pallas_src>
import jax
import jax.numpy as jnp
from jax.experimental import pallas as pl
from jax.experimental.pallas import tpu as pltpu


def _round_down_mult(x, m):
    return (x // m) * m


def _vmem_capacity_bytes():
    """Physical per-core VMEM (128 MiB v5e/v6e, 64 MiB v7x); conservative fallback."""
    try:
        return int(pltpu.get_tpu_info().vmem_capacity_bytes)
    except Exception:
        return 64 * 1024 * 1024


# Weight blocks never change across the grid (constant index_map): request
# single buffering when this JAX exposes pl.Buffered / pipeline_mode (halves
# their VMEM footprint at large D); otherwise fall back to default pipelining.
try:
    _WEIGHT_SPEC_KWARGS = {"pipeline_mode": pl.Buffered(1)}
    pl.BlockSpec((8, 128), lambda i: (0, 0), **_WEIGHT_SPEC_KWARGS)  # probe kwarg
except (AttributeError, TypeError):
    _WEIGHT_SPEC_KWARGS = {}


def _attn_body(h, ctx, w_h_fused, w_c_t, neg_mask, h_tilde_ref, attn_ref):
    """Shared compute.

    h:        (bt, D)    bf16
    ctx:      (bt, L, D) bf16
    w_h_fused:(D, 2D)    bf16  = [linear_in.T | h-half of linear_out.T]
    w_c_t:    (D, D)     bf16  = weighted_context-half of linear_out.T
    f32 accumulation throughout.
    """
    f32 = jnp.float32
    d = h.shape[-1]

    # One MXU push for both h-consuming projections:
    #   both[:, :d] = linear_in(h)              (the attention query "target")
    #   both[:, d:] = h-half of linear_out(cat(weighted_context, h))
    both = jnp.dot(h, w_h_fused, preferred_element_type=f32)      # (bt, 2D) f32
    target = both[:, :d]
    pre_h = both[:, d:]

    # attn scores = bmm(context, target.unsqueeze(2)).squeeze(2) -> (bt, L)
    # VPU multiply (bf16 ctx upcast to f32) + lane reduce: a per-batch matvec
    # would badly underfill the MXU.
    ctx_f = ctx.astype(f32)
    scores = jnp.sum(ctx_f * target[:, None, :], axis=-1)         # (bt, L) f32

    if neg_mask is not None:
        scores = jnp.where(neg_mask, -jnp.inf, scores)            # masked_fill_(mask, -inf)

    # softmax over L; divide -> EUP approx reciprocal (otherwise-idle slot)
    m = jnp.max(scores, axis=-1, keepdims=True)
    e = jnp.exp(scores - m)
    denom = jnp.sum(e, axis=-1, keepdims=True)
    attn = e * pl.reciprocal(denom, approx=True)
    attn_ref[...] = attn.astype(attn_ref.dtype)

    # weighted_context = bmm(attn.unsqueeze(1), context).squeeze(1) -> (bt, D)
    weighted = jnp.sum(attn[:, :, None] * ctx_f, axis=1)          # (bt, D) f32

    # h_tilde = tanh(linear_out(cat(weighted_context, h)))
    pre = pre_h + jnp.dot(weighted.astype(ctx.dtype), w_c_t,
                          preferred_element_type=f32)
    h_tilde_ref[...] = jnp.tanh(pre).astype(h_tilde_ref.dtype)


def _attention_kernel_nomask(h_ref, ctx_ref, w_h_ref, w_c_ref,
                             h_tilde_ref, attn_ref):
    _attn_body(h_ref[...], ctx_ref[...], w_h_ref[...], w_c_ref[...],
               None, h_tilde_ref, attn_ref)


def _attention_kernel_mask(h_ref, ctx_ref, mask_ref, w_h_ref, w_c_ref,
                           h_tilde_ref, attn_ref):
    _attn_body(h_ref[...], ctx_ref[...], w_h_ref[...], w_c_ref[...],
               mask_ref[...] != 0, h_tilde_ref, attn_ref)


def attention_forward(h, context, w_in, w_out, mask=None):
    """Pallas equivalent of Attention.forward(h, context, mask, cov=None).

    h: (B, D), context: (B, L, D), w_in: (D, D), w_out: (D, 2D)  (PyTorch
    nn.Linear convention, bias=False).  Returns (h_tilde, attn, new_cov=None).
    """
    B, D = h.shape
    _, L, _ = context.shape
    f32, bf16 = jnp.float32, jnp.bfloat16

    # --- bf16 HBM operands (halves the bytes of the dominant context stream);
    #     no padded copies: blocks below are full-extent in L and D. ---
    h_b = h.astype(bf16)
    ctx_b = context.astype(bf16)
    # fused h-consuming weight: [linear_in.T | h-half of linear_out.T] -> (D, 2D)
    w_h_fused = jnp.concatenate(
        [w_in.T.astype(bf16), w_out[:, D:].T.astype(bf16)], axis=1)
    # weighted_context-half of linear_out.T -> (D, D)
    w_c_t = w_out[:, :D].T.astype(bf16)

    # --- generation-aware batch tile + VMEM budget ---
    cap = _vmem_capacity_bytes()
    # per batch row: double-buffered bf16 ctx block + ~2 f32 in-kernel temporaries
    row_bytes = L * D * (2 * 2 + 2 * 4)
    budget = cap // 4                      # ~32 MiB on v5e/v6e, ~16 MiB on v7x
    if B <= 8:
        bt = B                             # full-extent block (exempt from 8-row rule)
    else:
        bt = max(8, min(256,
                        _round_down_mult(budget // row_bytes, 8),
                        _round_down_mult(B, 8)))
        if B >= 16:
            # keep >= 2 grid steps so both v7x TensorCores get work
            bt = min(bt, max(8, _round_down_mult(B // 2, 8)))
    grid = (pl.cdiv(B, bt),)               # ragged last batch block handled by Pallas

    est_vmem = (2 * bt * L * D * 2                      # double-buffered bf16 ctx blocks
                + 2 * bt * L * D * 4                    # f32 upcast / product temporaries
                + 2 * 3 * D * D * 2                     # weights (worst case double-buffered)
                + 2 * bt * (2 * D * 4 + D * 2 + 2 * L * 4)  # h, mask, h_tilde, attn buffers
                + (2 << 20))                            # headroom / compiler-internal scratch
    vmem_limit = min(max(est_vmem, 16 << 20), (cap * 3) // 4)

    compiler_params = pltpu.CompilerParams(
        dimension_semantics=("parallel",),
        vmem_limit_bytes=int(vmem_limit))

    h_spec = pl.BlockSpec((bt, D), lambda b: (b, 0))
    ctx_spec = pl.BlockSpec((bt, L, D), lambda b: (b, 0, 0))
    mask_spec = pl.BlockSpec((bt, L), lambda b: (b, 0))
    out_specs = (pl.BlockSpec((bt, D), lambda b: (b, 0)),
                 pl.BlockSpec((bt, L), lambda b: (b, 0)))
    out_shape = (jax.ShapeDtypeStruct((B, D), f32),
                 jax.ShapeDtypeStruct((B, L), f32))

    if mask is None:
        kernel = _attention_kernel_nomask
        data_specs = [h_spec, ctx_spec]
        args = (h_b, ctx_b)
    else:
        kernel = _attention_kernel_mask
        data_specs = [h_spec, ctx_spec, mask_spec]
        args = (h_b, ctx_b, mask.astype(f32))

    def run(weight_kwargs):
        w_h_spec = pl.BlockSpec((D, 2 * D), lambda b: (0, 0), **weight_kwargs)
        w_c_spec = pl.BlockSpec((D, D), lambda b: (0, 0), **weight_kwargs)
        return pl.pallas_call(
            kernel,
            out_shape=out_shape,
            grid=grid,
            in_specs=data_specs + [w_h_spec, w_c_spec],
            out_specs=out_specs,
            compiler_params=compiler_params,
        )(*args, w_h_fused, w_c_t)

    if _WEIGHT_SPEC_KWARGS:
        try:
            h_tilde, attn = run(_WEIGHT_SPEC_KWARGS)
        except Exception:
            # single-buffered weight blocks unsupported on this jax/libtpu:
            # retry with default (double-buffered) pipelining.
            h_tilde, attn = run({})
    else:
        h_tilde, attn = run({})

    # TODO(synk): coverage path (cov_rnn GRU + cov_linear) not implemented; the
    # reference module only enters it when coverage_dim is given.
    # TODO(synk): for very large L*D where even a bt=8 context block exceeds the
    # VMEM budget, add an L grid axis with flash-style online-softmax accumulation.
    new_cov = None
    return h_tilde, attn, new_cov


def _reference_forward(h, context, w_in, w_out, mask=None):
    """Plain-JAX f32 reference mirroring the PyTorch forward (cov=None)."""
    target = h @ w_in.T
    attn = jnp.einsum('bld,bd->bl', context, target)
    if mask is not None:
        attn = jnp.where(mask, -jnp.inf, attn)
    attn = jax.nn.softmax(attn, axis=1)
    weighted = jnp.einsum('bl,bld->bd', attn, context)
    h_tilde = jnp.tanh(jnp.concatenate([weighted, h], axis=1) @ w_out.T)
    return h_tilde, attn


if __name__ == "__main__":
    B, L, D = 2, 8, 32

    key = jax.random.PRNGKey(0)
    k_h, k_ctx, k_win, k_wout, k_mask = jax.random.split(key, 5)

    # quantize test inputs to bf16-representable values so the f32 reference
    # isolates kernel numerics (the wrapper's bf16 cast is then lossless)
    def q(x):
        return x.astype(jnp.bfloat16).astype(jnp.float32)

    h = q(jax.random.normal(k_h, (B, D), dtype=jnp.float32))
    context = q(jax.random.normal(k_ctx, (B, L, D), dtype=jnp.float32))

    # deterministic PyTorch-Linear-style uniform(-1/sqrt(in), 1/sqrt(in)) weights
    bound_in = 1.0 / (D ** 0.5)
    bound_out = 1.0 / ((2 * D) ** 0.5)
    w_in = q(jax.random.uniform(k_win, (D, D), jnp.float32, -bound_in, bound_in))
    w_out = q(jax.random.uniform(k_wout, (D, 2 * D), jnp.float32, -bound_out, bound_out))

    # residual error sources: EUP approx reciprocal in the softmax + the bf16
    # cast of the softmax-weighted context before the output projection
    TOL = dict(atol=1e-2, rtol=1e-2)

    # ---- no-mask path ----
    h_tilde, attn, new_cov = attention_forward(h, context, w_in, w_out, mask=None)
    jax.block_until_ready((h_tilde, attn))
    h_ref, a_ref = _reference_forward(h, context, w_in, w_out, mask=None)
    assert jnp.allclose(h_tilde, h_ref, **TOL), "h_tilde mismatch (no mask)"
    assert jnp.allclose(attn, a_ref, **TOL), "attn mismatch (no mask)"
    assert new_cov is None

    # ---- masked path (keep at least one unmasked position per row) ----
    mask = jax.random.uniform(k_mask, (B, L)) > 0.6
    mask = mask.at[:, 0].set(False)
    h_tilde_m, attn_m, _ = attention_forward(h, context, w_in, w_out, mask=mask)
    jax.block_until_ready((h_tilde_m, attn_m))
    h_ref_m, a_ref_m = _reference_forward(h, context, w_in, w_out, mask=mask)
    assert jnp.allclose(h_tilde_m, h_ref_m, **TOL), "h_tilde mismatch (masked)"
    assert jnp.allclose(attn_m, a_ref_m, **TOL), "attn mismatch (masked)"

    print("KERNEL_OK")
</pallas_src>

<mosaic_0001>
module attributes {stable_mosaic.version = 11 : i64} {
  func.func @_attention_kernel_nomask(%arg0: i32, %arg1: memref<2x32xbf16, #tpu.memory_space<vmem>>, %arg2: memref<2x8x32xbf16, #tpu.memory_space<vmem>>, %arg3: memref<32x64xbf16, #tpu.memory_space<vmem>>, %arg4: memref<32x32xbf16, #tpu.memory_space<vmem>>, %arg5: memref<2x32xf32, #tpu.memory_space<vmem>>, %arg6: memref<2x8xf32, #tpu.memory_space<vmem>>) attributes {dimension_semantics = [#tpu.dimension_semantics<parallel>], iteration_bounds = array<i64: 1>, scalar_prefetch = 0 : i64, scratch_operands = 0 : i64, tpu.core_type = #tpu.core_type<tc>, window_params = [{transform_indices = @transform_0, window_bounds = array<i64: 2, 32>}, {transform_indices = @transform_1, window_bounds = array<i64: 2, 8, 32>}, {pipeline_mode = #tpu.pipeline_mode<synchronous>, transform_indices = @transform_2, window_bounds = array<i64: 32, 64>}, {pipeline_mode = #tpu.pipeline_mode<synchronous>, transform_indices = @transform_3, window_bounds = array<i64: 32, 32>}, {transform_indices = @transform_4, window_bounds = array<i64: 2, 32>}, {transform_indices = @transform_5, window_bounds = array<i64: 2, 8>}]} {
    %c0 = arith.constant 0 : index
    %c0_0 = arith.constant 0 : index
    %0 = vector.load %arg1[%c0, %c0_0] : memref<2x32xbf16, #tpu.memory_space<vmem>>, vector<2x32xbf16>
    %c0_1 = arith.constant 0 : index
    %c0_2 = arith.constant 0 : index
    %c0_3 = arith.constant 0 : index
    %1 = vector.load %arg2[%c0_1, %c0_2, %c0_3] : memref<2x8x32xbf16, #tpu.memory_space<vmem>>, vector<2x8x32xbf16>
    %c0_4 = arith.constant 0 : index
    %c0_5 = arith.constant 0 : index
    %2 = vector.load %arg3[%c0_4, %c0_5] : memref<32x64xbf16, #tpu.memory_space<vmem>>, vector<32x64xbf16>
    %c0_6 = arith.constant 0 : index
    %c0_7 = arith.constant 0 : index
    %3 = vector.load %arg4[%c0_6, %c0_7] : memref<32x32xbf16, #tpu.memory_space<vmem>>, vector<32x32xbf16>
    %cst = arith.constant dense<0.000000e+00> : vector<2x64xf32>
    %4 = tpu.matmul %0, %2, %cst {dimension_numbers = #tpu.dot_dimension_numbers<[1], [0], [0], [1], [0, 0, 1, 1], [], []>} : vector<2x32xbf16>, vector<32x64xbf16>, vector<2x64xf32> -> vector<2x64xf32>
    %5 = vector.extract_strided_slice %4 {offsets = [0, 0], sizes = [2, 32], strides = [1, 1]} : vector<2x64xf32> to vector<2x32xf32>
    %6 = vector.extract_strided_slice %4 {offsets = [0, 32], sizes = [2, 32], strides = [1, 1]} : vector<2x64xf32> to vector<2x32xf32>
    %7 = arith.extf %1 : vector<2x8x32xbf16> to vector<2x8x32xf32>
    %8 = vector.shape_cast %5 : vector<2x32xf32> to vector<2x1x32xf32>
    %9 = vector.broadcast %8 : vector<2x1x32xf32> to vector<2x8x32xf32>
    %10 = arith.mulf %7, %9 : vector<2x8x32xf32>
    %cst_8 = arith.constant dense<0.000000e+00> : vector<2x8xf32>
    %11 = vector.multi_reduction <add>, %10, %cst_8 [2] : vector<2x8x32xf32> to vector<2x8xf32>
    %cst_9 = arith.constant dense<0xFF800000> : vector<2xf32>
    %12 = vector.multi_reduction <maximumf>, %11, %cst_9 [1] : vector<2x8xf32> to vector<2xf32>
    %13 = vector.shape_cast %12 : vector<2xf32> to vector<2x1xf32>
    %14 = vector.broadcast %13 : vector<2x1xf32> to vector<2x8xf32>
    %15 = arith.subf %11, %14 : vector<2x8xf32>
    %16 = math.exp %15 : vector<2x8xf32>
    %cst_10 = arith.constant dense<0.000000e+00> : vector<2xf32>
    %17 = vector.multi_reduction <add>, %16, %cst_10 [1] : vector<2x8xf32> to vector<2xf32>
    %18 = vector.shape_cast %17 : vector<2xf32> to vector<2x1xf32>
    %19 = tpu.reciprocal %18 {approx = true} : vector<2x1xf32> -> vector<2x1xf32>
    %20 = vector.broadcast %19 : vector<2x1xf32> to vector<2x8xf32>
    %21 = arith.mulf %16, %20 : vector<2x8xf32>
    %c0_11 = arith.constant 0 : index
    %c0_12 = arith.constant 0 : index
    %22 = vector.load %arg6[%c0_11, %c0_12] : memref<2x8xf32, #tpu.memory_space<vmem>>, vector<2x8xf32>
    tpu.vector_store %arg6[%c0_11, %c0_12], %21 {strides = array<i32>} : memref<2x8xf32, #tpu.memory_space<vmem>>, vector<2x8xf32>,
    %23 = vector.shape_cast %21 : vector<2x8xf32> to vector<2x8x1xf32>
    %24 = vector.broadcast %23 : vector<2x8x1xf32> to vector<2x8x32xf32>
    %25 = arith.mulf %24, %7 : vector<2x8x32xf32>
    %cst_13 = arith.constant dense<0.000000e+00> : vector<2x32xf32>
    %26 = vector.multi_reduction <add>, %25, %cst_13 [1] : vector<2x8x32xf32> to vector<2x32xf32>
    %27 = arith.truncf %26 : vector<2x32xf32> to vector<2x32xbf16>
    %cst_14 = arith.constant dense<0.000000e+00> : vector<2x32xf32>
    %28 = tpu.matmul %27, %3, %cst_14 {dimension_numbers = #tpu.dot_dimension_numbers<[1], [0], [0], [1], [0, 0, 1, 1], [], []>} : vector<2x32xbf16>, vector<32x32xbf16>, vector<2x32xf32> -> vector<2x32xf32>
    %29 = arith.addf %6, %28 : vector<2x32xf32>
    %30 = math.tanh %29 : vector<2x32xf32>
    %c0_15 = arith.constant 0 : index
    %c0_16 = arith.constant 0 : index
    %31 = vector.load %arg5[%c0_15, %c0_16] : memref<2x32xf32, #tpu.memory_space<vmem>>, vector<2x32xf32>
    tpu.vector_store %arg5[%c0_15, %c0_16], %30 {strides = array<i32>} : memref<2x32xf32, #tpu.memory_space<vmem>>, vector<2x32xf32>,
    return
  }
  func.func @transform_0(%arg0: i32) -> (i32, i32) {
    %c0_i32 = arith.constant 0 : i32
    %c0_i32_0 = arith.constant 0 : i32
    return %arg0, %c0_i32 : i32, i32
  }
  func.func @transform_1(%arg0: i32) -> (i32, i32, i32) {
    %c0_i32 = arith.constant 0 : i32
    %c0_i32_0 = arith.constant 0 : i32
    %c0_i32_1 = arith.constant 0 : i32
    return %arg0, %c0_i32, %c0_i32_0 : i32, i32, i32
  }
  func.func @transform_2(%arg0: i32) -> (i32, i32) {
    %c0_i32 = arith.constant 0 : i32
    %c0_i32_0 = arith.constant 0 : i32
    %c0_i32_1 = arith.constant 0 : i32
    return %c0_i32, %c0_i32_0 : i32, i32
  }
  func.func @transform_3(%arg0: i32) -> (i32, i32) {
    %c0_i32 = arith.constant 0 : i32
    %c0_i32_0 = arith.constant 0 : i32
    %c0_i32_1 = arith.constant 0 : i32
    return %c0_i32, %c0_i32_0 : i32, i32
  }
  func.func @transform_4(%arg0: i32) -> (i32, i32) {
    %c0_i32 = arith.constant 0 : i32
    %c0_i32_0 = arith.constant 0 : i32
    return %arg0, %c0_i32 : i32, i32
  }
  func.func @transform_5(%arg0: i32) -> (i32, i32) {
    %c0_i32 = arith.constant 0 : i32
    %c0_i32_0 = arith.constant 0 : i32
    return %arg0, %c0_i32 : i32, i32
  }
}

module attributes {stable_mosaic.version = 11 : i64} {
  func.func @_attention_kernel_nomask(%arg0: i32, %arg1: memref<2x32xbf16, #tpu.memory_space<vmem>>, %arg2: memref<2x8x32xbf16, #tpu.memory_space<vmem>>, %arg3: memref<32x64xbf16, #tpu.memory_space<vmem>>, %arg4: memref<32x32xbf16, #tpu.memory_space<vmem>>, %arg5: memref<2x32xf32, #tpu.memory_space<vmem>>, %arg6: memref<2x8xf32, #tpu.memory_space<vmem>>) attributes {dimension_semantics = [#tpu.dimension_semantics<parallel>], iteration_bounds = array<i64: 1>, scalar_prefetch = 0 : i64, scratch_operands = 0 : i64, tpu.core_type = #tpu.core_type<tc>, window_params = [{transform_indices = @transform_0, window_bounds = array<i64: 2, 32>}, {transform_indices = @transform_1, window_bounds = array<i64: 2, 8, 32>}, {pipeline_mode = #tpu.pipeline_mode<synchronous>, transform_indices = @transform_2, window_bounds = array<i64: 32, 64>}, {pipeline_mode = #tpu.pipeline_mode<synchronous>, transform_indices = @transform_3, window_bounds = array<i64: 32, 32>}, {transform_indices = @transform_4, window_bounds = array<i64: 2, 32>}, {transform_indices = @transform_5, window_bounds = array<i64: 2, 8>}]} {
    %c0 = arith.constant 0 : index
    %c0_0 = arith.constant 0 : index
    %0 = vector.load %arg1[%c0, %c0_0] : memref<2x32xbf16, #tpu.memory_space<vmem>>, vector<2x32xbf16>
    %c0_1 = arith.constant 0 : index
    %c0_2 = arith.constant 0 : index
    %c0_3 = arith.constant 0 : index
    %1 = vector.load %arg2[%c0_1, %c0_2, %c0_3] : memref<2x8x32xbf16, #tpu.memory_space<vmem>>, vector<2x8x32xbf16>
    %c0_4 = arith.constant 0 : index
    %c0_5 = arith.constant 0 : index
    %2 = vector.load %arg3[%c0_4, %c0_5] : memref<32x64xbf16, #tpu.memory_space<vmem>>, vector<32x64xbf16>
    %c0_6 = arith.constant 0 : index
    %c0_7 = arith.constant 0 : index
    %3 = vector.load %arg4[%c0_6, %c0_7] : memref<32x32xbf16, #tpu.memory_space<vmem>>, vector<32x32xbf16>
    %cst = arith.constant dense<0.000000e+00> : vector<2x64xf32>
    %4 = tpu.matmul %0, %2, %cst {dimension_numbers = #tpu.dot_dimension_numbers<[1], [0], [0], [1], [0, 0, 1, 1], [], []>} : vector<2x32xbf16>, vector<32x64xbf16>, vector<2x64xf32> -> vector<2x64xf32>
    %5 = vector.extract_strided_slice %4 {offsets = [0, 0], sizes = [2, 32], strides = [1, 1]} : vector<2x64xf32> to vector<2x32xf32>
    %6 = vector.extract_strided_slice %4 {offsets = [0, 32], sizes = [2, 32], strides = [1, 1]} : vector<2x64xf32> to vector<2x32xf32>
    %7 = arith.extf %1 : vector<2x8x32xbf16> to vector<2x8x32xf32>
    %8 = vector.shape_cast %5 : vector<2x32xf32> to vector<2x1x32xf32>
    %9 = vector.broadcast %8 : vector<2x1x32xf32> to vector<2x8x32xf32>
    %10 = arith.mulf %7, %9 : vector<2x8x32xf32>
    %cst_8 = arith.constant dense<0.000000e+00> : vector<2x8xf32>
    %11 = vector.multi_reduction <add>, %10, %cst_8 [2] : vector<2x8x32xf32> to vector<2x8xf32>
    %cst_9 = arith.constant dense<0xFF800000> : vector<2xf32>
    %12 = vector.multi_reduction <maximumf>, %11, %cst_9 [1] : vector<2x8xf32> to vector<2xf32>
    %13 = vector.shape_cast %12 : vector<2xf32> to vector<2x1xf32>
    %14 = vector.broadcast %13 : vector<2x1xf32> to vector<2x8xf32>
    %15 = arith.subf %11, %14 : vector<2x8xf32>
    %16 = math.exp %15 : vector<2x8xf32>
    %cst_10 = arith.constant dense<0.000000e+00> : vector<2xf32>
    %17 = vector.multi_reduction <add>, %16, %cst_10 [1] : vector<2x8xf32> to vector<2xf32>
    %18 = vector.shape_cast %17 : vector<2xf32> to vector<2x1xf32>
    %19 = tpu.reciprocal %18 {approx = true} : vector<2x1xf32> -> vector<2x1xf32>
    %20 = vector.broadcast %19 : vector<2x1xf32> to vector<2x8xf32>
    %21 = arith.mulf %16, %20 : vector<2x8xf32>
    %c0_11 = arith.constant 0 : index
    %c0_12 = arith.constant 0 : index
    %22 = vector.load %arg6[%c0_11, %c0_12] : memref<2x8xf32, #tpu.memory_space<vmem>>, vector<2x8xf32>
    tpu.vector_store %arg6[%c0_11, %c0_12], %21 {strides = array<i32>} : memref<2x8xf32, #tpu.memory_space<vmem>>, vector<2x8xf32>,
    %23 = vector.shape_cast %21 : vector<2x8xf32> to vector<2x8x1xf32>
    %24 = vector.broadcast %23 : vector<2x8x1xf32> to vector<2x8x32xf32>
    %25 = arith.mulf %24, %7 : vector<2x8x32xf32>
    %cst_13 = arith.constant dense<0.000000e+00> : vector<2x32xf32>
    %26 = vector.multi_reduction <add>, %25, %cst_13 [1] : vector<2x8x32xf32> to vector<2x32xf32>
    %27 = arith.truncf %26 : vector<2x32xf32> to vector<2x32xbf16>
    %cst_14 = arith.constant dense<0.000000e+00> : vector<2x32xf32>
    %28 = tpu.matmul %27, %3, %cst_14 {dimension_numbers = #tpu.dot_dimension_numbers<[1], [0], [0], [1], [0, 0, 1, 1], [], []>} : vector<2x32xbf16>, vector<32x32xbf16>, vector<2x32xf32> -> vector<2x32xf32>
    %29 = arith.addf %6, %28 : vector<2x32xf32>
    %30 = math.tanh %29 : vector<2x32xf32>
    %c0_15 = arith.constant 0 : index
    %c0_16 = arith.constant 0 : index
    %31 = vector.load %arg5[%c0_15, %c0_16] : memref<2x32xf32, #tpu.memory_space<vmem>>, vector<2x32xf32>
    tpu.vector_store %arg5[%c0_15, %c0_16], %30 {strides = array<i32>} : memref<2x32xf32, #tpu.memory_space<vmem>>, vector<2x32xf32>,
    return
  }
  func.func @transform_0(%arg0: i32) -> (i32, i32) {
    %c0_i32 = arith.constant 0 : i32
    %c0_i32_0 = arith.constant 0 : i32
    return %arg0, %c0_i32 : i32, i32
  }
  func.func @transform_1(%arg0: i32) -> (i32, i32, i32) {
    %c0_i32 = arith.constant 0 : i32
    %c0_i32_0 = arith.constant 0 : i32
    %c0_i32_1 = arith.constant 0 : i32
    return %arg0, %c0_i32, %c0_i32_0 : i32, i32, i32
  }
  func.func @transform_2(%arg0: i32) -> (i32, i32) {
    %c0_i32 = arith.constant 0 : i32
    %c0_i32_0 = arith.constant 0 : i32
    %c0_i32_1 = arith.constant 0 : i32
    return %c0_i32, %c0_i32_0 : i32, i32
  }
  func.func @transform_3(%arg0: i32) -> (i32, i32) {
    %c0_i32 = arith.constant 0 : i32
    %c0_i32_0 = arith.constant 0 : i32
    %c0_i32_1 = arith.constant 0 : i32
    return %c0_i32, %c0_i32_0 : i32, i32
  }
  func.func @transform_4(%arg0: i32) -> (i32, i32) {
    %c0_i32 = arith.constant 0 : i32
    %c0_i32_0 = arith.constant 0 : i32
    return %arg0, %c0_i32 : i32, i32
  }
  func.func @transform_5(%arg0: i32) -> (i32, i32) {
    %c0_i32 = arith.constant 0 : i32
    %c0_i32_0 = arith.constant 0 : i32
    return %arg0, %c0_i32 : i32, i32
  }
}

</mosaic_0001>

<llo_original>
// kernel: tpu_custom_call.1
$region0: #{tpu_custom_call.1}
  #allocation0 [shape = 'u32[]', space=smem, size = 0x4, offset = 0x4, fixed_abs, tag = 'smem constant byte address 0x4 - core index']
  #allocation1 [shape = 'u32[144,128]{1,0:T(1,128)}', space=vmem, size = 0x12000, scoped, tag = 'internal scratch']
  %s0 = inlined_call_operand.hbm [shape: bf16[2,32], index: 0, kind: input, shape index: {}]
  %s1 = inlined_call_operand.hbm [shape: bf16[2,8,32], index: 1, kind: input, shape index: {}]
  %s2 = inlined_call_operand.hbm [shape: bf16[32,64], index: 2, kind: input, shape index: {}]
  %s3 = inlined_call_operand.hbm [shape: bf16[32,32], index: 3, kind: input, shape index: {}]
  %s4 = inlined_call_operand.hbm [shape: f32[2,32], index: 4, kind: output, shape index: {0}]
  %s5 = inlined_call_operand.hbm [shape: f32[2,8], index: 5, kind: output, shape index: {1}]
  %6 = xla_tuple %s4, %s5
  %s7 = sld [smem:[#allocation0]]
  $region50: #{tpu_custom_call.1} parent=0
    _
  %s9 = ssub.s32 1, %s7
  %s10 = scalar_select 0, %s9, %s7
  $region1: #{tpu_custom_call.1} parent=0
    #allocation2 [shape = 'u8[512]{0}', space=vmem, size = 0x400, scoped, tag = 'input window, operand 0, single buffered']
    #allocation3 [shape = 's32[1]{0}', space=sflag, size = 0x4, scoped, tag = 'scoped memory for tpu_custom_call.1']
    #allocation4 [shape = 's32[1]{0}', space=sflag, size = 0x4, scoped, tag = 'scoped memory for tpu_custom_call.1']
    #allocation5 [shape = 'u8[4096]{0}', space=vmem, size = 0x1000, scoped, tag = 'input window, operand 1, single buffered']
    #allocation6 [shape = 's32[1]{0}', space=sflag, size = 0x4, scoped, tag = 'scoped memory for tpu_custom_call.1']
    #allocation7 [shape = 'u8[8192]{0}', space=vmem, size = 0x2000, scoped, tag = 'input window, operand 2, single buffered']
    #allocation8 [shape = 'u8[8192]{0}', space=vmem, size = 0x2000, scoped, tag = 'input window, operand 3, single buffered']
    #allocation9 [shape = 's32[1]{0}', space=sflag, size = 0x4, scoped, tag = 'scoped memory for tpu_custom_call.1']
    #allocation10 [shape = 'u8[1024]{0}', space=vmem, size = 0x400, scoped, tag = 'output window, operand 0, single buffered']
    #allocation11 [shape = 'u8[1024]{0}', space=vmem, size = 0x400, scoped, tag = 'output window, operand 1, single buffered']
    #allocation12 [shape = 's32[1]{0}', space=sflag, size = 0x4, scoped, tag = 'scoped memory for tpu_custom_call.1']
    %11 = vsyncpa [#allocation3], 0
    %12 = vsyncpa [#allocation6], 0
    %13 = vsyncpa [#allocation9], 0
    %14 = vsyncpa [#allocation4], 0
    %15 = vsyncpa [#allocation12], 0
    // Predicated region
    $region2: #{tpu_custom_call.1} parent=1 // pred_check
      _
    $region3: #{tpu_custom_call.1} parent=1 // pred_check_branch
      %17 = sbr.rel (0) target = $region5
    $region4: #{tpu_custom_call.1} parent=1 // pred_region
      %s19 = ssub.s32 16, 16
      %20 = vsyncadd [#allocation3], %s19
      %s22 = sshll.u32 [#allocation2], 4
      %s23 = int_to_ptr.vmem [resolvable:$true] %s22
      %25 = dma.hbm_to_vmem [thread:$0]  %s0, 16, %s23, [#allocation3]
    $region5: #{tpu_custom_call.1} parent=1 // pred_fallthru
      _
    // Predicated region
    $region6: #{tpu_custom_call.1} parent=1 // pred_check
      _
    $region7: #{tpu_custom_call.1} parent=1 // pred_check_branch
      %27 = sbr.rel (0) target = $region9
    $region8: #{tpu_custom_call.1} parent=1 // pred_region
      %s29 = ssub.s32 128, 128
      %30 = vsyncadd [#allocation6], %s29
      %s31 = sshll.u32 [#allocation5], 4
      %s32 = int_to_ptr.vmem [resolvable:$true] %s31
      %37 = dma.hbm_to_vmem [thread:$0]  %s1, 128, %s32, [#allocation6], 64, 64, 4
    $region9: #{tpu_custom_call.1} parent=1 // pred_fallthru
      _
    // Predicated region
    $region10: #{tpu_custom_call.1} parent=1 // pred_check
      _
    $region11: #{tpu_custom_call.1} parent=1 // pred_check_branch
      %39 = sbr.rel (0) target = $region13
    $region12: #{tpu_custom_call.1} parent=1 // pred_region
      %s41 = ssub.s32 256, 256
      %42 = vsyncadd [#allocation6], %s41
      %s43 = sshll.u32 [#allocation7], 4
      %s44 = int_to_ptr.vmem [resolvable:$true] %s43
      %49 = dma.hbm_to_vmem [thread:$0]  %s2, 256, %s44, [#allocation6], 64, 64, 4
    $region13: #{tpu_custom_call.1} parent=1 // pred_fallthru
      _
    // Predicated region
    $region14: #{tpu_custom_call.1} parent=1 // pred_check
      _
    $region15: #{tpu_custom_call.1} parent=1 // pred_check_branch
      %51 = sbr.rel (0) target = $region17
    $region16: #{tpu_custom_call.1} parent=1 // pred_region
      %s53 = ssub.s32 256, 256
      %54 = vsyncadd [#allocation9], %s53
      %s55 = sshll.u32 [#allocation8], 4
      %s56 = int_to_ptr.vmem [resolvable:$true] %s55
      %61 = dma.hbm_to_vmem [thread:$0]  %s3, 256, %s56, [#allocation9], 64, 64, 4
    $region17: #{tpu_custom_call.1} parent=1 // pred_fallthru
      _
    // Predicated region
    $region18: #{tpu_custom_call.1} parent=1 // pred_check
      _
    $region19: #{tpu_custom_call.1} parent=1 // pred_check_branch
      %63 = sbr.rel (0) target = $region21
    $region20: #{tpu_custom_call.1} parent=1 // pred_region
      %64 = dma.done [#allocation3], 16
    $region21: #{tpu_custom_call.1} parent=1 // pred_fallthru
      _
    // Predicated region
    $region22: #{tpu_custom_call.1} parent=1 // pred_check
      _
    $region23: #{tpu_custom_call.1} parent=1 // pred_check_branch
      %66 = sbr.rel (0) target = $region25
    $region24: #{tpu_custom_call.1} parent=1 // pred_region
      %67 = dma.done [#allocation6], 128
    $region25: #{tpu_custom_call.1} parent=1 // pred_fallthru
      _
    // Predicated region
    $region26: #{tpu_custom_call.1} parent=1 // pred_check
      _
    $region27: #{tpu_custom_call.1} parent=1 // pred_check_branch
      %69 = sbr.rel (0) target = $region29
    $region28: #{tpu_custom_call.1} parent=1 // pred_region
      %70 = dma.done [#allocation6], 256
    $region29: #{tpu_custom_call.1} parent=1 // pred_fallthru
      _
    // Predicated region
    $region30: #{tpu_custom_call.1} parent=1 // pred_check
      _
    $region31: #{tpu_custom_call.1} parent=1 // pred_check_branch
      %72 = sbr.rel (0) target = $region33
    $region32: #{tpu_custom_call.1} parent=1 // pred_region
      %73 = dma.done [#allocation9], 256
    $region33: #{tpu_custom_call.1} parent=1 // pred_fallthru
      _
    %v75 = vld [vmem:[#allocation2] sm:$0x1]
    %v76 = vld [vmem:[#allocation5] sm:$0xf]
    %v77 = vld [vmem:[#allocation5 + $0x4] sm:$0xf]
    %v78 = vld [vmem:[#allocation7] sm:$0xf]
    %v79 = vld [vmem:[#allocation7 + $0x4] sm:$0xf]
    %v80 = vld [vmem:[#allocation7 + $0x8] sm:$0xf]
    %v81 = vld [vmem:[#allocation7 + $0xc] sm:$0xf]
    %v82 = vld [vmem:[#allocation8] sm:$0xf]
    %v83 = vld [vmem:[#allocation8 + $0x4] sm:$0xf]
    %v84 = vld [vmem:[#allocation8 + $0x8] sm:$0xf]
    %v85 = vld [vmem:[#allocation8 + $0xc] sm:$0xf]
    %v90 = vunpack.c.l.b16 %v78
    %v91 = vunpack.c.l.b16 %v79
    %v92 = vunpack.c.l.b16 %v80
    %v93 = vunpack.c.l.b16 %v81
    %v94 = vpack.c.b16 %v91, %v90
    %v95 = vpack.c.b16 %v93, %v92
    %vm98 = vcmask 261120
    %v100 = vsel %vm98, %v75, 0
    %102 = vmatprep.subr.bf16.mxu0 0
    %103 = vmatpush1.bf16.msra.mxu0 %v94
    %104 = vmatprep.subr.bf16.mxu0 0
    %105 = vmatpush1.bf16.msra.mxu0 %v95
    %106 = vmatprep.subr.bf16.mxu0 0
    %107 = vmatpush1.bf16.msra.mxu0 0
    %108 = vmatprep.subr.bf16.mxu0 0
    %109 = vmatpush1.bf16.msra.mxu0 0
    %110 = vmatprep.subr.bf16.mxu0 0
    %111 = vmatpush1.bf16.msra.mxu0 0
    %112 = vmatprep.subr.bf16.mxu0 0
    %113 = vmatpush1.bf16.msra.mxu0 0
    %114 = vmatprep.subr.bf16.mxu0 0
    %115 = vmatpush1.bf16.msra.mxu0 0
    %116 = vmatprep.subr.bf16.mxu0 0
    %117 = vmatpush1.bf16.msra.mxu0 0
    %118 = vmatprep.subr.bf16.mxu0 0
    %119 = vmatpush1.bf16.msra.mxu0 0
    %120 = vmatprep.subr.bf16.mxu0 0
    %121 = vmatpush1.bf16.msra.mxu0 0
    %122 = vmatprep.subr.bf16.mxu0 0
    %123 = vmatpush1.bf16.msra.mxu0 0
    %124 = vmatprep.subr.bf16.mxu0 0
    %125 = vmatpush1.bf16.msra.mxu0 0
    %126 = vmatprep.subr.bf16.mxu0 0
    %127 = vmatpush1.bf16.msra.mxu0 0
    %128 = vmatprep.subr.bf16.mxu0 0
    %129 = vmatpush1.bf16.msra.mxu0 0
    %130 = vmatprep.subr.bf16.mxu0 0
    %131 = vmatpush1.bf16.msra.mxu0 0
    %132 = vmatprep.subr.bf16.mxu0 0
    %133 = vmatpush1.bf16.msra.mxu0 0
    %134 = vmatprep.mubr.bf16.mxu0 0
    %135 = vmatmul.mubr.bf16.gmra.mrb[0].mxu0 %v100
    %v136 = vpop.f32.mrb[0].mxu0
    %v137 = vadd.f32 0.0, %v136
    %v138 = vpop.f32.mrb[0].mxu0
    %v139 = vpop.f32.mrb[0].mxu0
    %v140 = vpop.f32.mrb[0].mxu0
    %141 = vdwg.mxu0
    %v142 = vunpack.c.l.bf16 %v76
    %v143 = vunpack.c.l.bf16 %v77
    %v146 = vunpack.c.l.s4 1966171168
    %v147 = vunpack.c.0.s8 %v146
    %v148 = vlaneseq
    %v149 = vshrl.u32 %v148, 7
    %v150 = vsub.s32 %v147, %v149
    %v151 = vrot.slane %v137, %v150
    %v152 = vcombine.high %v151, %v151
    %v154 = vunpack.c.l.s4 1966171168
    %v155 = vunpack.c.0.s8 %v154
    %v156 = vlaneseq
    %v157 = vshrl.u32 %v156, 7
    %v158 = vsub.s32 %v155, %v157
    %v159 = vrot.slane %v151, %v158
    %v161 = vunpack.c.l.s4 1966171168
    %v162 = vunpack.c.0.s8 %v161
    %v163 = vlaneseq
    %v164 = vshrl.u32 %v163, 7
    %v165 = vsub.s32 %v162, %v164
    %v166 = vrot.slane %v152, %v165
    %v167 = vlaneseq
    %v168 = vshrl.u32 %v167, 7
    %v169 = vsub.s32 0, %v168
    %v170 = vrot.slane %v159, %v169
    %v171 = vlaneseq
    %v172 = vshrl.u32 %v171, 7
    %v173 = vsub.s32 0, %v172
    %v174 = vrot.slane %v166, %v173
    %v177 = vmul.f32 %v142, %v170
    %v178 = vmul.f32 %v143, %v174
    %v179 = vsel %vm98, %v177, 0.0
    %180 = vadd.xlane.f32.xlu0 %v179
    %v181 = vpop.xlane.xlu0 %180
    %v182 = vsel %vm98, %v178, 0.0
    %183 = vadd.xlane.f32.xlu0 %v182
    %v184 = vpop.xlane.xlu0 %183
    %v187 = vlaneseq
    %v188 = vand.u32 %v187, 127
    %v189 = vlaneseq
    %v190 = vshrl.u32 %v189, 7
    %v191 = vsub.s32 %v188, %v190
    %v192 = vrot.slane %v181, %v191
    %v193 = vlaneseq
    %v194 = vshrl.u32 %v193, 7
    %v195 = vsub.s32 %v188, %v194
    %v196 = vrot.slane %v184, %v195
    %vm197 = vcmask 1041409
    %v198 = vsel %vm197, %v196, %v192
    %vm200 = vcmask 58368
    %v201 = vsel %vm200, %v198, -inf
    %202 = vmax.xlane.f32.xlu0 %v201
    %v203 = vpop.xlane.xlu0 %202
    %v205 = vlaneseq
    %v206 = vshrl.u32 %v205, 7
    %v207 = vsub.s32 0, %v206
    %v208 = vrot.slane %v203, %v207
    %v209 = vlaneseq
    %v210 = vshrl.u32 %v209, 7
    %v211 = vsub.s32 1, %v210
    %v212 = vrot.slane %v203, %v211
    %v215 = vsub.f32 %v181, %v208
    %v216 = vsub.f32 %v184, %v212
    %v217 = vmul.f32 %v215, 1.442695
    %v218 = vpow.pop %v217
    %v219 = vmul.f32 %v216, 1.442695
    %v220 = vpow.pop %v219
    %223 = vset.pattern.permute.xlu0 0
    %224 = vperm.xlu0 %223, %v218
    %v225 = vpop.permute.xlu0 %224
    %226 = vset.pattern.permute.xlu0 0
    %227 = vperm.xlu0 %226, %v220
    %v228 = vpop.permute.xlu0 %227
    %v229 = vlaneseq
    %v230 = vshrl.u32 %v229, 7
    %v231 = vsub.s32 %v188, %v230
    %v232 = vrot.slane %v225, %v231
    %v233 = vlaneseq
    %v234 = vshrl.u32 %v233, 7
    %v235 = vsub.s32 %v188, %v234
    %v236 = vrot.slane %v228, %v235
    %v237 = vsel %vm197, %v236, %v232
    %v239 = vsel %vm200, %v237, 0.0
    %240 = vadd.xlane.f32.xlu0 %v239
    %v241 = vpop.xlane.xlu0 %240
    %v242 = vrcp.pop %v241
    %v244 = vlaneseq
    %v245 = vshrl.u32 %v244, 7
    %v246 = vsub.s32 0, %v245
    %v247 = vrot.slane %v242, %v246
    %v248 = vlaneseq
    %v249 = vshrl.u32 %v248, 7
    %v250 = vsub.s32 1, %v249
    %v251 = vrot.slane %v242, %v250
    %v254 = vmul.f32 %v218, %v247
    %v255 = vmul.f32 %v220, %v251
    %258 = vset.pattern.permute.xlu0 0
    %259 = vperm.xlu0 %258, %v254
    %v260 = vpop.permute.xlu0 %259
    %261 = vset.pattern.permute.xlu0 0
    %262 = vperm.xlu0 %261, %v255
    %v263 = vpop.permute.xlu0 %262
    %v264 = vlaneseq
    %v265 = vshrl.u32 %v264, 7
    %v266 = vsub.s32 %v188, %v265
    %v267 = vrot.slane %v260, %v266
    %v268 = vlaneseq
    %v269 = vshrl.u32 %v268, 7
    %v270 = vsub.s32 %v188, %v269
    %v271 = vrot.slane %v263, %v270
    %v272 = vsel %vm197, %v271, %v267
    %274 = vst.msk [vmem:[#allocation11] sm:$0x3] %vm200, %v272
    %v277 = vmul.f32 %v260, %v142
    %v278 = vmul.f32 %v263, %v143
    %v279 = vsel %vm98, %v277, 0.0
    %v280 = vrot.slane %v279, 4
    %v281 = vadd.f32 %v279, %v280
    %v282 = vrot.slane %v281, 2
    %v283 = vadd.f32 %v281, %v282
    %v284 = vrot.slane %v283, 1
    %v285 = vadd.f32 %v283, %v284
    %v286 = vsel %vm98, %v278, 0.0
    %v287 = vrot.slane %v286, 4
    %v288 = vadd.f32 %v286, %v287
    %v289 = vrot.slane %v288, 2
    %v290 = vadd.f32 %v288, %v289
    %v291 = vrot.slane %v290, 1
    %v292 = vadd.f32 %v290, %v291
    %v293 = vpack.c.bf16 %v285, %v285
    %v294 = vpack.c.bf16 %v292, %v292
    %v297 = vunpack.c.l.b16 %v293
    %v298 = vunpack.c.l.b16 %v294
    %v299 = vsel %vm197, %v298, %v297
    %v300 = vpack.c.b16 %v299, %v299
    %v305 = vunpack.c.l.b16 %v82
    %v306 = vunpack.c.l.b16 %v83
    %v307 = vunpack.c.l.b16 %v84
    %v308 = vunpack.c.l.b16 %v85
    %v309 = vpack.c.b16 %v306, %v305
    %v310 = vpack.c.b16 %v308, %v307
    %v314 = vsel %vm98, %v300, 0
    %316 = vmatprep.subr.bf16.mxu0 0
    %317 = vmatpush1.bf16.msra.mxu0 %v309
    %318 = vmatprep.subr.bf16.mxu0 0
    %319 = vmatpush1.bf16.msra.mxu0 %v310
    %320 = vmatprep.subr.bf16.mxu0 0
    %321 = vmatpush1.bf16.msra.mxu0 0
    %322 = vmatprep.subr.bf16.mxu0 0
    %323 = vmatpush1.bf16.msra.mxu0 0
    %324 = vmatprep.subr.bf16.mxu0 0
    %325 = vmatpush1.bf16.msra.mxu0 0
    %326 = vmatprep.subr.bf16.mxu0 0
    %327 = vmatpush1.bf16.msra.mxu0 0
    %328 = vmatprep.subr.bf16.mxu0 0
    %329 = vmatpush1.bf16.msra.mxu0 0
    %330 = vmatprep.subr.bf16.mxu0 0
    %331 = vmatpush1.bf16.msra.mxu0 0
    %332 = vmatprep.subr.bf16.mxu0 0
    %333 = vmatpush1.bf16.msra.mxu0 0
    %334 = vmatprep.subr.bf16.mxu0 0
    %335 = vmatpush1.bf16.msra.mxu0 0
    %336 = vmatprep.subr.bf16.mxu0 0
    %337 = vmatpush1.bf16.msra.mxu0 0
    %338 = vmatprep.subr.bf16.mxu0 0
    %339 = vmatpush1.bf16.msra.mxu0 0
    %340 = vmatprep.subr.bf16.mxu0 0
    %341 = vmatpush1.bf16.msra.mxu0 0
    %342 = vmatprep.subr.bf16.mxu0 0
    %343 = vmatpush1.bf16.msra.mxu0 0
    %344 = vmatprep.subr.bf16.mxu0 0
    %345 = vmatpush1.bf16.msra.mxu0 0
    %346 = vmatprep.subr.bf16.mxu0 0
    %347 = vmatpush1.bf16.msra.mxu0 0
    %348 = vmatprep.mubr.bf16.mxu0 0
    %349 = vmatmul.mubr.bf16.gmra.mrb[0].mxu0 %v314
    %v350 = vpop.f32.mrb[0].mxu0
    %v351 = vadd.f32 0.0, %v350
    %v352 = vpop.f32.mrb[0].mxu0
    %v353 = vpop.f32.mrb[0].mxu0
    %v354 = vpop.f32.mrb[0].mxu0
    %355 = vdwg.mxu0
    %357 = vrot.lane.b32.xlu0 %v351, 32
    %v358 = vpop.permute.xlu0 %357
    %v360 = vadd.f32 %v137, %v358
    %v361 = vtanh.pop %v360
    %363 = vrot.lane.b32.xlu0 %v361, 96
    %v364 = vpop.permute.xlu0 %363
    %vm366 = vcmask 254976
    %367 = vst.msk [vmem:[#allocation10] sm:$0x3] %vm366, %v364
    // Predicated region
    $region34: #{tpu_custom_call.1} parent=1 // pred_check
      _
    $region35: #{tpu_custom_call.1} parent=1 // pred_check_branch
      %369 = sbr.rel (0) target = $region37
    $region36: #{tpu_custom_call.1} parent=1 // pred_region
      %s371 = ssub.s32 32, 32
      %372 = vsyncadd [#allocation4], %s371
      %s374 = sshll.u32 [#allocation10], 4
      %s375 = int_to_ptr.vmem [resolvable:$true] %s374
      %377 = dma.vmem_to_hbm [thread:$0]  %s375, 32, %s4, [#allocation4]
    $region37: #{tpu_custom_call.1} parent=1 // pred_fallthru
      _
    // Predicated region
    $region38: #{tpu_custom_call.1} parent=1 // pred_check
      _
    $region39: #{tpu_custom_call.1} parent=1 // pred_check_branch
      %379 = sbr.rel (0) target = $region41
    $region40: #{tpu_custom_call.1} parent=1 // pred_region
      %s381 = ssub.s32 32, 32
      %382 = vsyncadd [#allocation12], %s381
      %s384 = sshll.u32 [#allocation11], 4
      %s385 = int_to_ptr.vmem [resolvable:$true] %s384
      %387 = dma.vmem_to_hbm [thread:$0]  %s385, 32, %s5, [#allocation12]
    $region41: #{tpu_custom_call.1} parent=1 // pred_fallthru
      _
    // Predicated region
    $region42: #{tpu_custom_call.1} parent=1 // pred_check
      _
    $region43: #{tpu_custom_call.1} parent=1 // pred_check_branch
      %389 = sbr.rel (0) target = $region45
    $region44: #{tpu_custom_call.1} parent=1 // pred_region
      %390 = dma.done [#allocation4], 32
    $region45: #{tpu_custom_call.1} parent=1 // pred_fallthru
      _
    // Predicated region
    $region46: #{tpu_custom_call.1} parent=1 // pred_check
      _
    $region47: #{tpu_custom_call.1} parent=1 // pred_check_branch
      %392 = sbr.rel (0) target = $region49
    $region48: #{tpu_custom_call.1} parent=1 // pred_region
      %393 = dma.done [#allocation12], 32
    $region49: #{tpu_custom_call.1} parent=1 // pred_fallthru
      _
    %394 = vsyncpa [#allocation3], 1
    %395 = vsyncpa [#allocation6], 1
    %396 = vsyncpa [#allocation9], 1
    %397 = vsyncpa [#allocation4], 1
    %398 = vsyncpa [#allocation12], 1

// kernel: tpu_custom_call.1
$region0: #{tpu_custom_call.1}
  #allocation0 [shape = 'u32[]', space=smem, size = 0x4, offset = 0x4, fixed_abs, tag = 'smem constant byte address 0x4 - core index']
  #allocation1 [shape = 'u32[144,128]{1,0:T(1,128)}', space=vmem, size = 0x12000, scoped, tag = 'internal scratch']
  %s0 = inlined_call_operand.hbm [shape: bf16[2,32], index: 0, kind: input, shape index: {}]
  %s1 = inlined_call_operand.hbm [shape: bf16[2,8,32], index: 1, kind: input, shape index: {}]
  %s2 = inlined_call_operand.hbm [shape: bf16[32,64], index: 2, kind: input, shape index: {}]
  %s3 = inlined_call_operand.hbm [shape: bf16[32,32], index: 3, kind: input, shape index: {}]
  %s4 = inlined_call_operand.hbm [shape: f32[2,32], index: 4, kind: output, shape index: {0}]
  %s5 = inlined_call_operand.hbm [shape: f32[2,8], index: 5, kind: output, shape index: {1}]
  %6 = xla_tuple %s4, %s5
  %s7 = sld [smem:[#allocation0]]
  $region50: #{tpu_custom_call.1} parent=0
    _
  %s9 = ssub.s32 1, %s7
  %s10 = scalar_select 0, %s9, %s7
  $region1: #{tpu_custom_call.1} parent=0
    #allocation2 [shape = 'u8[512]{0}', space=vmem, size = 0x400, scoped, tag = 'input window, operand 0, single buffered']
    #allocation3 [shape = 's32[1]{0}', space=sflag, size = 0x4, scoped, tag = 'scoped memory for tpu_custom_call.1']
    #allocation4 [shape = 's32[1]{0}', space=sflag, size = 0x4, scoped, tag = 'scoped memory for tpu_custom_call.1']
    #allocation5 [shape = 'u8[4096]{0}', space=vmem, size = 0x1000, scoped, tag = 'input window, operand 1, single buffered']
    #allocation6 [shape = 's32[1]{0}', space=sflag, size = 0x4, scoped, tag = 'scoped memory for tpu_custom_call.1']
    #allocation7 [shape = 'u8[8192]{0}', space=vmem, size = 0x2000, scoped, tag = 'input window, operand 2, single buffered']
    #allocation8 [shape = 'u8[8192]{0}', space=vmem, size = 0x2000, scoped, tag = 'input window, operand 3, single buffered']
    #allocation9 [shape = 's32[1]{0}', space=sflag, size = 0x4, scoped, tag = 'scoped memory for tpu_custom_call.1']
    #allocation10 [shape = 'u8[1024]{0}', space=vmem, size = 0x400, scoped, tag = 'output window, operand 0, single buffered']
    #allocation11 [shape = 'u8[1024]{0}', space=vmem, size = 0x400, scoped, tag = 'output window, operand 1, single buffered']
    #allocation12 [shape = 's32[1]{0}', space=sflag, size = 0x4, scoped, tag = 'scoped memory for tpu_custom_call.1']
    %11 = vsyncpa [#allocation3], 0
    %12 = vsyncpa [#allocation6], 0
    %13 = vsyncpa [#allocation9], 0
    %14 = vsyncpa [#allocation4], 0
    %15 = vsyncpa [#allocation12], 0
    // Predicated region
    $region2: #{tpu_custom_call.1} parent=1 // pred_check
      _
    $region3: #{tpu_custom_call.1} parent=1 // pred_check_branch
      %17 = sbr.rel (0) target = $region5
    $region4: #{tpu_custom_call.1} parent=1 // pred_region
      %s19 = ssub.s32 16, 16
      %20 = vsyncadd [#allocation3], %s19
      %s22 = sshll.u32 [#allocation2], 4
      %s23 = int_to_ptr.vmem [resolvable:$true] %s22
      %25 = dma.hbm_to_vmem [thread:$0]  %s0, 16, %s23, [#allocation3]
    $region5: #{tpu_custom_call.1} parent=1 // pred_fallthru
      _
    // Predicated region
    $region6: #{tpu_custom_call.1} parent=1 // pred_check
      _
    $region7: #{tpu_custom_call.1} parent=1 // pred_check_branch
      %27 = sbr.rel (0) target = $region9
    $region8: #{tpu_custom_call.1} parent=1 // pred_region
      %s29 = ssub.s32 128, 128
      %30 = vsyncadd [#allocation6], %s29
      %s31 = sshll.u32 [#allocation5], 4
      %s32 = int_to_ptr.vmem [resolvable:$true] %s31
      %37 = dma.hbm_to_vmem [thread:$0]  %s1, 128, %s32, [#allocation6], 64, 64, 4
    $region9: #{tpu_custom_call.1} parent=1 // pred_fallthru
      _
    // Predicated region
    $region10: #{tpu_custom_call.1} parent=1 // pred_check
      _
    $region11: #{tpu_custom_call.1} parent=1 // pred_check_branch
      %39 = sbr.rel (0) target = $region13
    $region12: #{tpu_custom_call.1} parent=1 // pred_region
      %s41 = ssub.s32 256, 256
      %42 = vsyncadd [#allocation6], %s41
      %s43 = sshll.u32 [#allocation7], 4
      %s44 = int_to_ptr.vmem [resolvable:$true] %s43
      %49 = dma.hbm_to_vmem [thread:$0]  %s2, 256, %s44, [#allocation6], 64, 64, 4
    $region13: #{tpu_custom_call.1} parent=1 // pred_fallthru
      _
    // Predicated region
    $region14: #{tpu_custom_call.1} parent=1 // pred_check
      _
    $region15: #{tpu_custom_call.1} parent=1 // pred_check_branch
      %51 = sbr.rel (0) target = $region17
    $region16: #{tpu_custom_call.1} parent=1 // pred_region
      %s53 = ssub.s32 256, 256
      %54 = vsyncadd [#allocation9], %s53
      %s55 = sshll.u32 [#allocation8], 4
      %s56 = int_to_ptr.vmem [resolvable:$true] %s55
      %61 = dma.hbm_to_vmem [thread:$0]  %s3, 256, %s56, [#allocation9], 64, 64, 4
    $region17: #{tpu_custom_call.1} parent=1 // pred_fallthru
      _
    // Predicated region
    $region18: #{tpu_custom_call.1} parent=1 // pred_check
      _
    $region19: #{tpu_custom_call.1} parent=1 // pred_check_branch
      %63 = sbr.rel (0) target = $region21
    $region20: #{tpu_custom_call.1} parent=1 // pred_region
      %64 = dma.done [#allocation3], 16
    $region21: #{tpu_custom_call.1} parent=1 // pred_fallthru
      _
    // Predicated region
    $region22: #{tpu_custom_call.1} parent=1 // pred_check
      _
    $region23: #{tpu_custom_call.1} parent=1 // pred_check_branch
      %66 = sbr.rel (0) target = $region25
    $region24: #{tpu_custom_call.1} parent=1 // pred_region
      %67 = dma.done [#allocation6], 128
    $region25: #{tpu_custom_call.1} parent=1 // pred_fallthru
      _
    // Predicated region
    $region26: #{tpu_custom_call.1} parent=1 // pred_check
      _
    $region27: #{tpu_custom_call.1} parent=1 // pred_check_branch
      %69 = sbr.rel (0) target = $region29
    $region28: #{tpu_custom_call.1} parent=1 // pred_region
      %70 = dma.done [#allocation6], 256
    $region29: #{tpu_custom_call.1} parent=1 // pred_fallthru
      _
    // Predicated region
    $region30: #{tpu_custom_call.1} parent=1 // pred_check
      _
    $region31: #{tpu_custom_call.1} parent=1 // pred_check_branch
      %72 = sbr.rel (0) target = $region33
    $region32: #{tpu_custom_call.1} parent=1 // pred_region
      %73 = dma.done [#allocation9], 256
    $region33: #{tpu_custom_call.1} parent=1 // pred_fallthru
      _
    %v75 = vld [vmem:[#allocation2] sm:$0x1]
    %v76 = vld [vmem:[#allocation5] sm:$0xf]
    %v77 = vld [vmem:[#allocation5 + $0x4] sm:$0xf]
    %v78 = vld [vmem:[#allocation7] sm:$0xf]
    %v79 = vld [vmem:[#allocation7 + $0x4] sm:$0xf]
    %v80 = vld [vmem:[#allocation7 + $0x8] sm:$0xf]
    %v81 = vld [vmem:[#allocation7 + $0xc] sm:$0xf]
    %v82 = vld [vmem:[#allocation8] sm:$0xf]
    %v83 = vld [vmem:[#allocation8 + $0x4] sm:$0xf]
    %v84 = vld [vmem:[#allocation8 + $0x8] sm:$0xf]
    %v85 = vld [vmem:[#allocation8 + $0xc] sm:$0xf]
    %v90 = vunpack.c.l.b16 %v78
    %v91 = vunpack.c.l.b16 %v79
    %v92 = vunpack.c.l.b16 %v80
    %v93 = vunpack.c.l.b16 %v81
    %v94 = vpack.c.b16 %v91, %v90
    %v95 = vpack.c.b16 %v93, %v92
    %vm98 = vcmask 261120
    %v100 = vsel %vm98, %v75, 0
    %102 = vmatprep.subr.bf16.mxu0 0
    %103 = vmatpush1.bf16.msra.mxu0 %v94
    %104 = vmatprep.subr.bf16.mxu0 0
    %105 = vmatpush1.bf16.msra.mxu0 %v95
    %106 = vmatprep.subr.bf16.mxu0 0
    %107 = vmatpush1.bf16.msra.mxu0 0
    %108 = vmatprep.subr.bf16.mxu0 0
    %109 = vmatpush1.bf16.msra.mxu0 0
    %110 = vmatprep.subr.bf16.mxu0 0
    %111 = vmatpush1.bf16.msra.mxu0 0
    %112 = vmatprep.subr.bf16.mxu0 0
    %113 = vmatpush1.bf16.msra.mxu0 0
    %114 = vmatprep.subr.bf16.mxu0 0
    %115 = vmatpush1.bf16.msra.mxu0 0
    %116 = vmatprep.subr.bf16.mxu0 0
    %117 = vmatpush1.bf16.msra.mxu0 0
    %118 = vmatprep.subr.bf16.mxu0 0
    %119 = vmatpush1.bf16.msra.mxu0 0
    %120 = vmatprep.subr.bf16.mxu0 0
    %121 = vmatpush1.bf16.msra.mxu0 0
    %122 = vmatprep.subr.bf16.mxu0 0
    %123 = vmatpush1.bf16.msra.mxu0 0
    %124 = vmatprep.subr.bf16.mxu0 0
    %125 = vmatpush1.bf16.msra.mxu0 0
    %126 = vmatprep.subr.bf16.mxu0 0
    %127 = vmatpush1.bf16.msra.mxu0 0
    %128 = vmatprep.subr.bf16.mxu0 0
    %129 = vmatpush1.bf16.msra.mxu0 0
    %130 = vmatprep.subr.bf16.mxu0 0
    %131 = vmatpush1.bf16.msra.mxu0 0
    %132 = vmatprep.subr.bf16.mxu0 0
    %133 = vmatpush1.bf16.msra.mxu0 0
    %134 = vmatprep.mubr.bf16.mxu0 0
    %135 = vmatmul.mubr.bf16.gmra.mrb[0].mxu0 %v100
    %v136 = vpop.f32.mrb[0].mxu0
    %v137 = vadd.f32 0.0, %v136
    %v138 = vpop.f32.mrb[0].mxu0
    %v139 = vpop.f32.mrb[0].mxu0
    %v140 = vpop.f32.mrb[0].mxu0
    %141 = vdwg.mxu0
    %v142 = vunpack.c.l.bf16 %v76
    %v143 = vunpack.c.l.bf16 %v77
    %v146 = vunpack.c.l.s4 1966171168
    %v147 = vunpack.c.0.s8 %v146
    %v148 = vlaneseq
    %v149 = vshrl.u32 %v148, 7
    %v150 = vsub.s32 %v147, %v149
    %v151 = vrot.slane %v137, %v150
    %v152 = vcombine.high %v151, %v151
    %v154 = vunpack.c.l.s4 1966171168
    %v155 = vunpack.c.0.s8 %v154
    %v156 = vlaneseq
    %v157 = vshrl.u32 %v156, 7
    %v158 = vsub.s32 %v155, %v157
    %v159 = vrot.slane %v151, %v158
    %v161 = vunpack.c.l.s4 1966171168
    %v162 = vunpack.c.0.s8 %v161
    %v163 = vlaneseq
    %v164 = vshrl.u32 %v163, 7
    %v165 = vsub.s32 %v162, %v164
    %v166 = vrot.slane %v152, %v165
    %v167 = vlaneseq
    %v168 = vshrl.u32 %v167, 7
    %v169 = vsub.s32 0, %v168
    %v170 = vrot.slane %v159, %v169
    %v171 = vlaneseq
    %v172 = vshrl.u32 %v171, 7
    %v173 = vsub.s32 0, %v172
    %v174 = vrot.slane %v166, %v173
    %v177 = vmul.f32 %v142, %v170
    %v178 = vmul.f32 %v143, %v174
    %v179 = vsel %vm98, %v177, 0.0
    %180 = vadd.xlane.f32.xlu0 %v179
    %v181 = vpop.xlane.xlu0 %180
    %v182 = vsel %vm98, %v178, 0.0
    %183 = vadd.xlane.f32.xlu0 %v182
    %v184 = vpop.xlane.xlu0 %183
    %v187 = vlaneseq
    %v188 = vand.u32 %v187, 127
    %v189 = vlaneseq
    %v190 = vshrl.u32 %v189, 7
    %v191 = vsub.s32 %v188, %v190
    %v192 = vrot.slane %v181, %v191
    %v193 = vlaneseq
    %v194 = vshrl.u32 %v193, 7
    %v195 = vsub.s32 %v188, %v194
    %v196 = vrot.slane %v184, %v195
    %vm197 = vcmask 1041409
    %v198 = vsel %vm197, %v196, %v192
    %vm200 = vcmask 58368
    %v201 = vsel %vm200, %v198, -inf
    %202 = vmax.xlane.f32.xlu0 %v201
    %v203 = vpop.xlane.xlu0 %202
    %v205 = vlaneseq
    %v206 = vshrl.u32 %v205, 7
    %v207 = vsub.s32 0, %v206
    %v208 = vrot.slane %v203, %v207
    %v209 = vlaneseq
    %v210 = vshrl.u32 %v209, 7
    %v211 = vsub.s32 1, %v210
    %v212 = vrot.slane %v203, %v211
    %v215 = vsub.f32 %v181, %v208
    %v216 = vsub.f32 %v184, %v212
    %v217 = vmul.f32 %v215, 1.442695
    %v218 = vpow.pop %v217
    %v219 = vmul.f32 %v216, 1.442695
    %v220 = vpow.pop %v219
    %223 = vset.pattern.permute.xlu0 0
    %224 = vperm.xlu0 %223, %v218
    %v225 = vpop.permute.xlu0 %224
    %226 = vset.pattern.permute.xlu0 0
    %227 = vperm.xlu0 %226, %v220
    %v228 = vpop.permute.xlu0 %227
    %v229 = vlaneseq
    %v230 = vshrl.u32 %v229, 7
    %v231 = vsub.s32 %v188, %v230
    %v232 = vrot.slane %v225, %v231
    %v233 = vlaneseq
    %v234 = vshrl.u32 %v233, 7
    %v235 = vsub.s32 %v188, %v234
    %v236 = vrot.slane %v228, %v235
    %v237 = vsel %vm197, %v236, %v232
    %v239 = vsel %vm200, %v237, 0.0
    %240 = vadd.xlane.f32.xlu0 %v239
    %v241 = vpop.xlane.xlu0 %240
    %v242 = vrcp.pop %v241
    %v244 = vlaneseq
    %v245 = vshrl.u32 %v244, 7
    %v246 = vsub.s32 0, %v245
    %v247 = vrot.slane %v242, %v246
    %v248 = vlaneseq
    %v249 = vshrl.u32 %v248, 7
    %v250 = vsub.s32 1, %v249
    %v251 = vrot.slane %v242, %v250
    %v254 = vmul.f32 %v218, %v247
    %v255 = vmul.f32 %v220, %v251
    %258 = vset.pattern.permute.xlu0 0
    %259 = vperm.xlu0 %258, %v254
    %v260 = vpop.permute.xlu0 %259
    %261 = vset.pattern.permute.xlu0 0
    %262 = vperm.xlu0 %261, %v255
    %v263 = vpop.permute.xlu0 %262
    %v264 = vlaneseq
    %v265 = vshrl.u32 %v264, 7
    %v266 = vsub.s32 %v188, %v265
    %v267 = vrot.slane %v260, %v266
    %v268 = vlaneseq
    %v269 = vshrl.u32 %v268, 7
    %v270 = vsub.s32 %v188, %v269
    %v271 = vrot.slane %v263, %v270
    %v272 = vsel %vm197, %v271, %v267
    %274 = vst.msk [vmem:[#allocation11] sm:$0x3] %vm200, %v272
    %v277 = vmul.f32 %v260, %v142
    %v278 = vmul.f32 %v263, %v143
    %v279 = vsel %vm98, %v277, 0.0
    %v280 = vrot.slane %v279, 4
    %v281 = vadd.f32 %v279, %v280
    %v282 = vrot.slane %v281, 2
    %v283 = vadd.f32 %v281, %v282
    %v284 = vrot.slane %v283, 1
    %v285 = vadd.f32 %v283, %v284
    %v286 = vsel %vm98, %v278, 0.0
    %v287 = vrot.slane %v286, 4
    %v288 = vadd.f32 %v286, %v287
    %v289 = vrot.slane %v288, 2
    %v290 = vadd.f32 %v288, %v289
    %v291 = vrot.slane %v290, 1
    %v292 = vadd.f32 %v290, %v291
    %v293 = vpack.c.bf16 %v285, %v285
    %v294 = vpack.c.bf16 %v292, %v292
    %v297 = vunpack.c.l.b16 %v293
    %v298 = vunpack.c.l.b16 %v294
    %v299 = vsel %vm197, %v298, %v297
    %v300 = vpack.c.b16 %v299, %v299
    %v305 = vunpack.c.l.b16 %v82
    %v306 = vunpack.c.l.b16 %v83
    %v307 = vunpack.c.l.b16 %v84
    %v308 = vunpack.c.l.b16 %v85
    %v309 = vpack.c.b16 %v306, %v305
    %v310 = vpack.c.b16 %v308, %v307
    %v314 = vsel %vm98, %v300, 0
    %316 = vmatprep.subr.bf16.mxu0 0
    %317 = vmatpush1.bf16.msra.mxu0 %v309
    %318 = vmatprep.subr.bf16.mxu0 0
    %319 = vmatpush1.bf16.msra.mxu0 %v310
    %320 = vmatprep.subr.bf16.mxu0 0
    %321 = vmatpush1.bf16.msra.mxu0 0
    %322 = vmatprep.subr.bf16.mxu0 0
    %323 = vmatpush1.bf16.msra.mxu0 0
    %324 = vmatprep.subr.bf16.mxu0 0
    %325 = vmatpush1.bf16.msra.mxu0 0
    %326 = vmatprep.subr.bf16.mxu0 0
    %327 = vmatpush1.bf16.msra.mxu0 0
    %328 = vmatprep.subr.bf16.mxu0 0
    %329 = vmatpush1.bf16.msra.mxu0 0
    %330 = vmatprep.subr.bf16.mxu0 0
    %331 = vmatpush1.bf16.msra.mxu0 0
    %332 = vmatprep.subr.bf16.mxu0 0
    %333 = vmatpush1.bf16.msra.mxu0 0
    %334 = vmatprep.subr.bf16.mxu0 0
    %335 = vmatpush1.bf16.msra.mxu0 0
    %336 = vmatprep.subr.bf16.mxu0 0
    %337 = vmatpush1.bf16.msra.mxu0 0
    %338 = vmatprep.subr.bf16.mxu0 0
    %339 = vmatpush1.bf16.msra.mxu0 0
    %340 = vmatprep.subr.bf16.mxu0 0
    %341 = vmatpush1.bf16.msra.mxu0 0
    %342 = vmatprep.subr.bf16.mxu0 0
    %343 = vmatpush1.bf16.msra.mxu0 0
    %344 = vmatprep.subr.bf16.mxu0 0
    %345 = vmatpush1.bf16.msra.mxu0 0
    %346 = vmatprep.subr.bf16.mxu0 0
    %347 = vmatpush1.bf16.msra.mxu0 0
    %348 = vmatprep.mubr.bf16.mxu0 0
    %349 = vmatmul.mubr.bf16.gmra.mrb[0].mxu0 %v314
    %v350 = vpop.f32.mrb[0].mxu0
    %v351 = vadd.f32 0.0, %v350
    %v352 = vpop.f32.mrb[0].mxu0
    %v353 = vpop.f32.mrb[0].mxu0
    %v354 = vpop.f32.mrb[0].mxu0
    %355 = vdwg.mxu0
    %357 = vrot.lane.b32.xlu0 %v351, 32
    %v358 = vpop.permute.xlu0 %357
    %v360 = vadd.f32 %v137, %v358
    %v361 = vtanh.pop %v360
    %363 = vrot.lane.b32.xlu0 %v361, 96
    %v364 = vpop.permute.xlu0 %363
    %vm366 = vcmask 254976
    %367 = vst.msk [vmem:[#allocation10] sm:$0x3] %vm366, %v364
    // Predicated region
    $region34: #{tpu_custom_call.1} parent=1 // pred_check
      _
    $region35: #{tpu_custom_call.1} parent=1 // pred_check_branch
      %369 = sbr.rel (0) target = $region37
    $region36: #{tpu_custom_call.1} parent=1 // pred_region
      %s371 = ssub.s32 32, 32
      %372 = vsyncadd [#allocation4], %s371
      %s374 = sshll.u32 [#allocation10], 4
      %s375 = int_to_ptr.vmem [resolvable:$true] %s374
      %377 = dma.vmem_to_hbm [thread:$0]  %s375, 32, %s4, [#allocation4]
    $region37: #{tpu_custom_call.1} parent=1 // pred_fallthru
      _
    // Predicated region
    $region38: #{tpu_custom_call.1} parent=1 // pred_check
      _
    $region39: #{tpu_custom_call.1} parent=1 // pred_check_branch
      %379 = sbr.rel (0) target = $region41
    $region40: #{tpu_custom_call.1} parent=1 // pred_region
      %s381 = ssub.s32 32, 32
      %382 = vsyncadd [#allocation12], %s381
      %s384 = sshll.u32 [#allocation11], 4
      %s385 = int_to_ptr.vmem [resolvable:$true] %s384
      %387 = dma.vmem_to_hbm [thread:$0]  %s385, 32, %s5, [#allocation12]
    $region41: #{tpu_custom_call.1} parent=1 // pred_fallthru
      _
    // Predicated region
    $region42: #{tpu_custom_call.1} parent=1 // pred_check
      _
    $region43: #{tpu_custom_call.1} parent=1 // pred_check_branch
      %389 = sbr.rel (0) target = $region45
    $region44: #{tpu_custom_call.1} parent=1 // pred_region
      %390 = dma.done [#allocation4], 32
    $region45: #{tpu_custom_call.1} parent=1 // pred_fallthru
      _
    // Predicated region
    $region46: #{tpu_custom_call.1} parent=1 // pred_check
      _
    $region47: #{tpu_custom_call.1} parent=1 // pred_check_branch
      %392 = sbr.rel (0) target = $region49
    $region48: #{tpu_custom_call.1} parent=1 // pred_region
      %393 = dma.done [#allocation12], 32
    $region49: #{tpu_custom_call.1} parent=1 // pred_fallthru
      _
    %394 = vsyncpa [#allocation3], 1
    %395 = vsyncpa [#allocation6], 1
    %396 = vsyncpa [#allocation9], 1
    %397 = vsyncpa [#allocation4], 1
    %398 = vsyncpa [#allocation12], 1

</llo_original>
